<compile_context>
chip_gen: v5e
topology: v5e:2x2
jax: 0.10.0
libtpu: 0.0.40
codegen_flags: <defaults>
</compile_context>

<pallas_src>
import functools

import jax
import jax.numpy as jnp
from jax import lax
from jax.experimental import pallas as pl
from jax.experimental.pallas import tpu as pltpu

MARGIN = 1.0


def _round_up(x, m):
    return (x + m - 1) // m * m


def _transh_kernel(h_ref, t_ref, r_ref, w_ref, out_ref, *,
                   batch, tile_b, margin, feat_axis):
    """One batch tile of the TransH margin loss.

    feat_axis == 2: refs are (2, TB, D)  (lane axis = embedding dim)
    feat_axis == 1: refs are (2, D, TB)  (lane axis = batch; dense for D < 128)
    Leading axis of size 2 is (positive, negative).

    out_ref: (1, 8, 128) f32 block; the tile's partial loss is written at
    element [0, 0, 0] and zeros elsewhere, so the wrapper reduces with a
    dense jnp.sum over the whole partials array.
    """
    # Upcast on load: keeps accumulation in f32 even if the wrapper streams
    # bf16 embeddings to halve HBM read traffic.
    h = h_ref[...].astype(jnp.float32)
    t = t_ref[...].astype(jnp.float32)
    r = r_ref[...].astype(jnp.float32)
    w = w_ref[...].astype(jnp.float32)

    def project(e):
        # e - <e, w> * w : projection onto the hyperplane with normal w.
        return e - jnp.sum(e * w, axis=feat_axis, keepdims=True) * w

    diff = project(h) + r - project(t)                  # (2, ., .)
    sq = jnp.sum(diff * diff, axis=feat_axis)           # (2, TB)
    dist = jnp.sqrt(sq)                                  # EUP sqrt
    pos_dist = dist[0:1, :]                              # (1, TB)
    neg_dist = dist[1:2, :]                              # (1, TB)

    # Mask rows beyond the real batch (the tail tile may contain garbage; the
    # where-mask after the hinge keeps any NaN/Inf out of the sum).
    row = pl.program_id(0) * tile_b + lax.broadcasted_iota(jnp.int32, (1, tile_b), 1)
    hinge = jnp.where(row < batch,
                      jnp.maximum(margin + pos_dist - neg_dist, 0.0),
                      0.0)
    partial = jnp.sum(hinge)

    ii = lax.broadcasted_iota(jnp.int32, (1, 8, 128), 1)
    jj = lax.broadcasted_iota(jnp.int32, (1, 8, 128), 2)
    out_ref[...] = jnp.where((ii == 0) & (jj == 0), partial, 0.0).astype(out_ref.dtype)


def _vmem_capacity_bytes():
    try:
        info = pltpu.get_tpu_info()
        cap = getattr(info, "vmem_capacity_bytes", None)
        if cap:
            return int(cap)
    except Exception:
        pass
    return 64 << 20  # conservative default (v7x has the smallest VMEM)


def transh_loss_pallas(entity_emb, relation_emb, normal_emb,
                       positive_triples, negative_triples, *,
                       tile_b=2048, stream_dtype=None, batch_lanes=None):
    """positive/negative_triples: (B, 3) int32 with columns (h, t, r).

    stream_dtype: optional dtype (e.g. jnp.bfloat16) for the gathered streams;
                  the kernel always accumulates in f32.
    batch_lanes:  None -> auto (True when D < 128).  When True, streams are
                  laid out (2, D, B) so the 128-lane axis carries the batch.
    """
    B = int(positive_triples.shape[0])
    D = int(entity_emb.shape[1])

    # --- Embedding gathers (glue, plain JAX).  Concatenated pos/neg indices
    # -> a single gather per stream; no jnp.stack copy, no jnp.pad copy.
    h_idx = jnp.concatenate([positive_triples[:, 0], negative_triples[:, 0]])
    t_idx = jnp.concatenate([positive_triples[:, 1], negative_triples[:, 1]])
    r_idx = jnp.concatenate([positive_triples[:, 2], negative_triples[:, 2]])

    def gather(table, idx):
        g = jnp.take(table, idx, axis=0)          # (2B, D)
        if stream_dtype is not None:
            g = g.astype(stream_dtype)            # fuses into the gather
        return g.reshape(2, B, D)

    h = gather(entity_emb, h_idx)
    t = gather(entity_emb, t_idx)
    r = gather(relation_emb, r_idx)
    w = gather(normal_emb, r_idx)

    if batch_lanes is None:
        batch_lanes = D < 128
    if batch_lanes:
        # Lane axis carries the batch; D becomes a cheap sublane reduce axis.
        # (XLA typically folds this transpose into the gather fusion.)
        h = h.transpose(0, 2, 1)   # (2, D, B)
        t = t.transpose(0, 2, 1)
        r = r.transpose(0, 2, 1)
        w = w.transpose(0, 2, 1)

    itemsize = jnp.dtype(h.dtype).itemsize
    sub = 8 * max(1, 4 // itemsize)      # sublane granule (16 for bf16 packing)

    # --- Tile size from a per-generation VMEM budget.
    vmem_cap = _vmem_capacity_bytes()
    budget = vmem_cap // 2               # for 4 streams x 2 pipeline buffers
    if batch_lanes:
        granule = 128
        per_row_bytes = 4 * 2 * 2 * _round_up(D, sub) * itemsize
    else:
        granule = sub
        per_row_bytes = 4 * 2 * 2 * _round_up(D, 128) * itemsize
    tb_vmem = max(budget // per_row_bytes, granule)
    # >= 4 tiles so the "parallel" grid axis can span both TCs on megacore parts.
    tb_split = _round_up(pl.cdiv(B, 4), granule)
    tb = max(min(int(tile_b), int(tb_vmem), int(tb_split)), granule)
    tb = _round_up(tb, granule)
    if batch_lanes:
        if tb >= B:
            tb = B                        # full last dim is always a legal block
    else:
        tb = min(tb, _round_up(B, granule))
    grid = pl.cdiv(B, tb)

    if batch_lanes:
        tile_bytes = 2 * _round_up(D, sub) * _round_up(tb, 128) * itemsize
        in_spec = pl.BlockSpec((2, D, tb), lambda i: (0, 0, i))
        feat_axis = 1
    else:
        tile_bytes = 2 * _round_up(tb, sub) * _round_up(D, 128) * itemsize
        in_spec = pl.BlockSpec((2, tb, D), lambda i: (0, i, 0))
        feat_axis = 2

    est_bytes = 4 * 2 * tile_bytes                       # 4 streams, double-buffered
    vmem_limit = max(2 * est_bytes, 32 << 20)
    vmem_limit = min(vmem_limit, max(vmem_cap - (16 << 20), 32 << 20))
    vmem_limit = max(vmem_limit, est_bytes + (4 << 20))  # never below the real need
    vmem_limit = int(min(vmem_limit, vmem_cap))

    kernel = functools.partial(_transh_kernel, batch=B, tile_b=tb,
                               margin=MARGIN, feat_axis=feat_axis)

    partials = pl.pallas_call(
        kernel,
        out_shape=jax.ShapeDtypeStruct((grid, 8, 128), jnp.float32),
        grid=(grid,),
        in_specs=[in_spec, in_spec, in_spec, in_spec],
        out_specs=pl.BlockSpec((1, 8, 128), lambda i: (i, 0, 0)),
        compiler_params=pltpu.CompilerParams(
            # Per-tile partial sums => no cross-step dependence => tiles can be
            # split across TensorCores on megacore parts.
            dimension_semantics=("parallel",),
            vmem_limit_bytes=vmem_limit,
        ),
    )(h, t, r, w)

    # Each block holds its partial at [0, 0] and zeros elsewhere -> dense sum.
    return jnp.sum(partials)


def _xavier_uniform(key, shape):
    # torch xavier_uniform_ on an nn.Embedding weight (num, dim).
    limit = (6.0 / (shape[0] + shape[1])) ** 0.5
    return jax.random.uniform(key, shape, jnp.float32, -limit, limit)


def _reference_loss(entity_emb, relation_emb, normal_emb, pos, neg):
    def project(e, w):
        return e - jnp.sum(e * w, axis=1, keepdims=True) * w
    hp, tp, rp = entity_emb[pos[:, 0]], entity_emb[pos[:, 1]], relation_emb[pos[:, 2]]
    wp = normal_emb[pos[:, 2]]
    hn, tn, rn = entity_emb[neg[:, 0]], entity_emb[neg[:, 1]], relation_emb[neg[:, 2]]
    wn = normal_emb[neg[:, 2]]
    pd = jnp.linalg.norm(project(hp, wp) + rp - project(tp, wp), axis=1)
    nd = jnp.linalg.norm(project(hn, wn) + rn - project(tn, wn), axis=1)
    return jnp.sum(jax.nn.relu(MARGIN + pd - nd))


if __name__ == "__main__":
    num_entities = 64
    num_relations = 16
    embedding_dim = 32
    batch = 8

    key = jax.random.PRNGKey(0)
    k_e, k_r, k_w, k_p, k_n = jax.random.split(key, 5)

    entity_emb = _xavier_uniform(k_e, (num_entities, embedding_dim))
    relation_emb = _xavier_uniform(k_r, (num_relations, embedding_dim))
    normal_emb = _xavier_uniform(k_w, (num_relations, embedding_dim))

    def make_triples(k):
        k1, k2, k3 = jax.random.split(k, 3)
        h = jax.random.randint(k1, (batch, 1), 0, num_entities, jnp.int32)
        t = jax.random.randint(k2, (batch, 1), 0, num_entities, jnp.int32)
        r = jax.random.randint(k3, (batch, 1), 0, num_relations, jnp.int32)
        return jnp.concatenate([h, t, r], axis=1)  # (B, 3) = (h, t, r)

    positive_triples = make_triples(k_p)
    negative_triples = make_triples(k_n)

    ref = _reference_loss(entity_emb, relation_emb, normal_emb,
                          positive_triples, negative_triples)

    # Default path: D=32 < 128 -> batch-on-lanes layout.
    loss = transh_loss_pallas(entity_emb, relation_emb, normal_emb,
                              positive_triples, negative_triples)
    loss = jax.block_until_ready(loss)
    assert jnp.allclose(loss, ref, rtol=1e-5, atol=1e-5), (loss, ref)

    # Also exercise the D-on-lanes layout (used when D >= 128).
    loss_rm = transh_loss_pallas(entity_emb, relation_emb, normal_emb,
                                 positive_triples, negative_triples,
                                 batch_lanes=False)
    loss_rm = jax.block_until_ready(loss_rm)
    assert jnp.allclose(loss_rm, ref, rtol=1e-5, atol=1e-5), (loss_rm, ref)

    print("KERNEL_OK")
</pallas_src>

<mosaic_0001>
module attributes {stable_mosaic.version = 11 : i64} {
  func.func @_transh_kernel(%arg0: i32, %arg1: memref<2x32x8xf32, #tpu.memory_space<vmem>>, %arg2: memref<2x32x8xf32, #tpu.memory_space<vmem>>, %arg3: memref<2x32x8xf32, #tpu.memory_space<vmem>>, %arg4: memref<2x32x8xf32, #tpu.memory_space<vmem>>, %arg5: memref<1x8x128xf32, #tpu.memory_space<vmem>>) attributes {dimension_semantics = [#tpu.dimension_semantics<parallel>], iteration_bounds = array<i64: 1>, scalar_prefetch = 0 : i64, scratch_operands = 0 : i64, tpu.core_type = #tpu.core_type<tc>, window_params = [{transform_indices = @transform_0, window_bounds = array<i64: 2, 32, 8>}, {transform_indices = @transform_1, window_bounds = array<i64: 2, 32, 8>}, {transform_indices = @transform_2, window_bounds = array<i64: 2, 32, 8>}, {transform_indices = @transform_3, window_bounds = array<i64: 2, 32, 8>}, {transform_indices = @transform_4, window_bounds = array<i64: 1, 8, 128>}]} {
    %c0 = arith.constant 0 : index
    %c0_0 = arith.constant 0 : index
    %c0_1 = arith.constant 0 : index
    %0 = vector.load %arg1[%c0, %c0_0, %c0_1] : memref<2x32x8xf32, #tpu.memory_space<vmem>>, vector<2x32x8xf32>
    %c0_2 = arith.constant 0 : index
    %c0_3 = arith.constant 0 : index
    %c0_4 = arith.constant 0 : index
    %1 = vector.load %arg2[%c0_2, %c0_3, %c0_4] : memref<2x32x8xf32, #tpu.memory_space<vmem>>, vector<2x32x8xf32>
    %c0_5 = arith.constant 0 : index
    %c0_6 = arith.constant 0 : index
    %c0_7 = arith.constant 0 : index
    %2 = vector.load %arg3[%c0_5, %c0_6, %c0_7] : memref<2x32x8xf32, #tpu.memory_space<vmem>>, vector<2x32x8xf32>
    %c0_8 = arith.constant 0 : index
    %c0_9 = arith.constant 0 : index
    %c0_10 = arith.constant 0 : index
    %3 = vector.load %arg4[%c0_8, %c0_9, %c0_10] : memref<2x32x8xf32, #tpu.memory_space<vmem>>, vector<2x32x8xf32>
    %4 = arith.mulf %0, %3 : vector<2x32x8xf32>
    %cst = arith.constant dense<0.000000e+00> : vector<2x8xf32>
    %5 = vector.multi_reduction <add>, %4, %cst [1] : vector<2x32x8xf32> to vector<2x8xf32>
    %6 = vector.shape_cast %5 : vector<2x8xf32> to vector<2x1x8xf32>
    %7 = vector.broadcast %6 : vector<2x1x8xf32> to vector<2x32x8xf32>
    %8 = arith.mulf %7, %3 : vector<2x32x8xf32>
    %9 = arith.subf %0, %8 : vector<2x32x8xf32>
    %10 = arith.addf %9, %2 : vector<2x32x8xf32>
    %11 = arith.mulf %1, %3 : vector<2x32x8xf32>
    %cst_11 = arith.constant dense<0.000000e+00> : vector<2x8xf32>
    %12 = vector.multi_reduction <add>, %11, %cst_11 [1] : vector<2x32x8xf32> to vector<2x8xf32>
    %13 = vector.shape_cast %12 : vector<2x8xf32> to vector<2x1x8xf32>
    %14 = vector.broadcast %13 : vector<2x1x8xf32> to vector<2x32x8xf32>
    %15 = arith.mulf %14, %3 : vector<2x32x8xf32>
    %16 = arith.subf %1, %15 : vector<2x32x8xf32>
    %17 = arith.subf %10, %16 : vector<2x32x8xf32>
    %18 = arith.mulf %17, %17 : vector<2x32x8xf32>
    %cst_12 = arith.constant dense<0.000000e+00> : vector<2x8xf32>
    %19 = vector.multi_reduction <add>, %18, %cst_12 [1] : vector<2x32x8xf32> to vector<2x8xf32>
    %20 = math.sqrt %19 : vector<2x8xf32>
    %21 = vector.extract_strided_slice %20 {offsets = [0, 0], sizes = [1, 8], strides = [1, 1]} : vector<2x8xf32> to vector<1x8xf32>
    %22 = vector.extract_strided_slice %20 {offsets = [1, 0], sizes = [1, 8], strides = [1, 1]} : vector<2x8xf32> to vector<1x8xf32>
    %c8_i32 = arith.constant 8 : i32
    %23 = arith.muli %arg0, %c8_i32 : i32
    %24 = tpu.iota {dimensions = array<i32: 1>} : vector<1x8xi32>
    %25 = vector.broadcast %23 : i32 to vector<1x8xi32>
    %26 = arith.addi %25, %24 : vector<1x8xi32>
    %c8_i32_13 = arith.constant 8 : i32
    %27 = vector.broadcast %c8_i32_13 : i32 to vector<1x8xi32>
    %28 = arith.cmpi slt, %26, %27 : vector<1x8xi32>
    %cst_14 = arith.constant 1.000000e+00 : f32
    %29 = vector.broadcast %cst_14 : f32 to vector<1x8xf32>
    %30 = arith.addf %29, %21 : vector<1x8xf32>
    %31 = arith.subf %30, %22 : vector<1x8xf32>
    %cst_15 = arith.constant 0.000000e+00 : f32
    %32 = vector.broadcast %cst_15 : f32 to vector<1x8xf32>
    %33 = arith.maximumf %31, %32 : vector<1x8xf32>
    %cst_16 = arith.constant 0.000000e+00 : f32
    %34 = vector.broadcast %cst_16 : f32 to vector<1x8xf32>
    %35 = arith.select %28, %33, %34 : vector<1x8xi1>, vector<1x8xf32>
    %36 = vector.shape_cast %35 : vector<1x8xf32> to vector<1x1x8xf32>
    %cst_17 = arith.constant dense<0.000000e+00> : vector<1xf32>
    %37 = vector.multi_reduction <add>, %36, %cst_17 [1, 2] : vector<1x1x8xf32> to vector<1xf32>
    %38 = vector.shape_cast %37 : vector<1xf32> to vector<1x1x1xf32>
    %39 = vector.extract %38[0, 0, 0] : f32 from vector<1x1x1xf32>
    %40 = tpu.iota {dimensions = array<i32: 1>} : vector<1x8x128xi32>
    %41 = tpu.iota {dimensions = array<i32: 2>} : vector<1x8x128xi32>
    %c0_i32 = arith.constant 0 : i32
    %42 = vector.broadcast %c0_i32 : i32 to vector<1x8x128xi32>
    %43 = arith.cmpi eq, %40, %42 : vector<1x8x128xi32>
    %c0_i32_18 = arith.constant 0 : i32
    %44 = vector.broadcast %c0_i32_18 : i32 to vector<1x8x128xi32>
    %45 = arith.cmpi eq, %41, %44 : vector<1x8x128xi32>
    %46 = arith.andi %43, %45 : vector<1x8x128xi1>
    %cst_19 = arith.constant 0.000000e+00 : f32
    %47 = vector.broadcast %39 : f32 to vector<1x8x128xf32>
    %48 = vector.broadcast %cst_19 : f32 to vector<1x8x128xf32>
    %49 = arith.select %46, %47, %48 : vector<1x8x128xi1>, vector<1x8x128xf32>
    %c0_20 = arith.constant 0 : index
    %c0_21 = arith.constant 0 : index
    %c0_22 = arith.constant 0 : index
    %50 = vector.load %arg5[%c0_20, %c0_21, %c0_22] : memref<1x8x128xf32, #tpu.memory_space<vmem>>, vector<1x8x128xf32>
    tpu.vector_store %arg5[%c0_20, %c0_21, %c0_22], %49 {strides = array<i32>} : memref<1x8x128xf32, #tpu.memory_space<vmem>>, vector<1x8x128xf32>,
    return
  }
  func.func @transform_0(%arg0: i32) -> (i32, i32, i32) {
    %c0_i32 = arith.constant 0 : i32
    %c0_i32_0 = arith.constant 0 : i32
    %c0_i32_1 = arith.constant 0 : i32
    return %c0_i32, %c0_i32_0, %arg0 : i32, i32, i32
  }
  func.func @transform_1(%arg0: i32) -> (i32, i32, i32) {
    %c0_i32 = arith.constant 0 : i32
    %c0_i32_0 = arith.constant 0 : i32
    %c0_i32_1 = arith.constant 0 : i32
    return %c0_i32, %c0_i32_0, %arg0 : i32, i32, i32
  }
  func.func @transform_2(%arg0: i32) -> (i32, i32, i32) {
    %c0_i32 = arith.constant 0 : i32
    %c0_i32_0 = arith.constant 0 : i32
    %c0_i32_1 = arith.constant 0 : i32
    return %c0_i32, %c0_i32_0, %arg0 : i32, i32, i32
  }
  func.func @transform_3(%arg0: i32) -> (i32, i32, i32) {
    %c0_i32 = arith.constant 0 : i32
    %c0_i32_0 = arith.constant 0 : i32
    %c0_i32_1 = arith.constant 0 : i32
    return %c0_i32, %c0_i32_0, %arg0 : i32, i32, i32
  }
  func.func @transform_4(%arg0: i32) -> (i32, i32, i32) {
    %c0_i32 = arith.constant 0 : i32
    %c0_i32_0 = arith.constant 0 : i32
    %c0_i32_1 = arith.constant 0 : i32
    return %arg0, %c0_i32, %c0_i32_0 : i32, i32, i32
  }
}

</mosaic_0001>

<llo_original>
// kernel: tpu_custom_call.1
$region0: #{tpu_custom_call.1}
  #allocation0 [shape = 'u32[]', space=smem, size = 0x4, offset = 0x4, fixed_abs, tag = 'smem constant byte address 0x4 - core index']
  #allocation1 [shape = 'u32[72,128]{1,0:T(1,128)}', space=vmem, size = 0x9000, scoped, tag = 'internal scratch']
  %s0 = inlined_call_operand.vmem [shape: f32[2,32,8], index: 0, kind: input, shape index: {}]
  %s1 = inlined_call_operand.vmem [shape: f32[2,32,8], index: 1, kind: input, shape index: {}]
  %s2 = inlined_call_operand.vmem [shape: f32[2,32,8], index: 2, kind: input, shape index: {}]
  %s3 = inlined_call_operand.vmem [shape: f32[2,32,8], index: 3, kind: input, shape index: {}]
  %s4 = inlined_call_operand.hbm [shape: f32[1,8,128], index: 4, kind: output, shape index: {}]
  %s5 = sld [smem:[#allocation0]]
  $region26: #{tpu_custom_call.1} parent=0
    _
  %s7 = ssub.s32 1, %s5
  %s8 = scalar_select 0, %s7, %s5
  $region1: #{tpu_custom_call.1} parent=0
    #allocation2 [shape = 'u8[4096]{0}', space=vmem, size = 0x1000, scoped, tag = 'output window, operand 0, single buffered']
    #allocation3 [shape = 's32[1]{0}', space=sflag, size = 0x4, scoped, tag = 'scoped memory for tpu_custom_call.1']
    %9 = vsyncpa [#allocation3], 0
    // Predicated region
    $region2: #{tpu_custom_call.1} parent=1 // pred_check
      _
    $region3: #{tpu_custom_call.1} parent=1 // pred_check_branch
      %11 = sbr.rel (0) target = $region5
    $region4: #{tpu_custom_call.1} parent=1 // pred_region
      _
    $region5: #{tpu_custom_call.1} parent=1 // pred_fallthru
      _
    // Predicated region
    $region6: #{tpu_custom_call.1} parent=1 // pred_check
      _
    $region7: #{tpu_custom_call.1} parent=1 // pred_check_branch
      %13 = sbr.rel (0) target = $region9
    $region8: #{tpu_custom_call.1} parent=1 // pred_region
      _
    $region9: #{tpu_custom_call.1} parent=1 // pred_fallthru
      _
    // Predicated region
    $region10: #{tpu_custom_call.1} parent=1 // pred_check
      _
    $region11: #{tpu_custom_call.1} parent=1 // pred_check_branch
      %15 = sbr.rel (0) target = $region13
    $region12: #{tpu_custom_call.1} parent=1 // pred_region
      _
    $region13: #{tpu_custom_call.1} parent=1 // pred_fallthru
      _
    // Predicated region
    $region14: #{tpu_custom_call.1} parent=1 // pred_check
      _
    $region15: #{tpu_custom_call.1} parent=1 // pred_check_branch
      %17 = sbr.rel (0) target = $region17
    $region16: #{tpu_custom_call.1} parent=1 // pred_region
      _
    $region17: #{tpu_custom_call.1} parent=1 // pred_fallthru
      _
    %v18 = vld [vmem:[%s0] sm:$0xff]
    %v19 = vld [vmem:[%s0 + $0x8] sm:$0xff]
    %v20 = vld [vmem:[%s0 + $0x10] sm:$0xff]
    %v21 = vld [vmem:[%s0 + $0x18] sm:$0xff]
    %v22 = vld [vmem:[%s0 + $0x20] sm:$0xff]
    %v23 = vld [vmem:[%s0 + $0x28] sm:$0xff]
    %v24 = vld [vmem:[%s0 + $0x30] sm:$0xff]
    %v25 = vld [vmem:[%s0 + $0x38] sm:$0xff]
    %v26 = vld [vmem:[%s1] sm:$0xff]
    %v27 = vld [vmem:[%s1 + $0x8] sm:$0xff]
    %v28 = vld [vmem:[%s1 + $0x10] sm:$0xff]
    %v29 = vld [vmem:[%s1 + $0x18] sm:$0xff]
    %v30 = vld [vmem:[%s1 + $0x20] sm:$0xff]
    %v31 = vld [vmem:[%s1 + $0x28] sm:$0xff]
    %v32 = vld [vmem:[%s1 + $0x30] sm:$0xff]
    %v33 = vld [vmem:[%s1 + $0x38] sm:$0xff]
    %v34 = vld [vmem:[%s2] sm:$0xff]
    %v35 = vld [vmem:[%s2 + $0x8] sm:$0xff]
    %v36 = vld [vmem:[%s2 + $0x10] sm:$0xff]
    %v37 = vld [vmem:[%s2 + $0x18] sm:$0xff]
    %v38 = vld [vmem:[%s2 + $0x20] sm:$0xff]
    %v39 = vld [vmem:[%s2 + $0x28] sm:$0xff]
    %v40 = vld [vmem:[%s2 + $0x30] sm:$0xff]
    %v41 = vld [vmem:[%s2 + $0x38] sm:$0xff]
    %v42 = vld [vmem:[%s3] sm:$0xff]
    %v43 = vld [vmem:[%s3 + $0x8] sm:$0xff]
    %v44 = vld [vmem:[%s3 + $0x10] sm:$0xff]
    %v45 = vld [vmem:[%s3 + $0x18] sm:$0xff]
    %v46 = vld [vmem:[%s3 + $0x20] sm:$0xff]
    %v47 = vld [vmem:[%s3 + $0x28] sm:$0xff]
    %v48 = vld [vmem:[%s3 + $0x30] sm:$0xff]
    %v49 = vld [vmem:[%s3 + $0x38] sm:$0xff]
    %v50 = vmul.f32 %v18, %v42
    %v51 = vmul.f32 %v19, %v43
    %v52 = vmul.f32 %v20, %v44
    %v53 = vmul.f32 %v21, %v45
    %v54 = vmul.f32 %v22, %v46
    %v55 = vmul.f32 %v23, %v47
    %v56 = vmul.f32 %v24, %v48
    %v57 = vmul.f32 %v25, %v49
    %vm58 = vcmask 64512
    %v59 = vsel %vm58, %v50, 0.0
    %v60 = vsel %vm58, %v51, 0.0
    %v61 = vadd.f32 %v59, %v60
    %v62 = vsel %vm58, %v52, 0.0
    %v63 = vadd.f32 %v61, %v62
    %v64 = vsel %vm58, %v53, 0.0
    %v65 = vadd.f32 %v63, %v64
    %v66 = vrot.slane %v65, 4
    %v67 = vadd.f32 %v65, %v66
    %v68 = vrot.slane %v67, 2
    %v69 = vadd.f32 %v67, %v68
    %v70 = vrot.slane %v69, 1
    %v71 = vadd.f32 %v69, %v70
    %v72 = vsel %vm58, %v54, 0.0
    %v73 = vsel %vm58, %v55, 0.0
    %v74 = vadd.f32 %v72, %v73
    %v75 = vsel %vm58, %v56, 0.0
    %v76 = vadd.f32 %v74, %v75
    %v77 = vsel %vm58, %v57, 0.0
    %v78 = vadd.f32 %v76, %v77
    %v79 = vrot.slane %v78, 4
    %v80 = vadd.f32 %v78, %v79
    %v81 = vrot.slane %v80, 2
    %v82 = vadd.f32 %v80, %v81
    %v83 = vrot.slane %v82, 1
    %v84 = vadd.f32 %v82, %v83
    %v85 = vmul.f32 %v71, %v42
    %v86 = vmul.f32 %v71, %v43
    %v87 = vmul.f32 %v71, %v44
    %v88 = vmul.f32 %v71, %v45
    %v89 = vmul.f32 %v84, %v46
    %v90 = vmul.f32 %v84, %v47
    %v91 = vmul.f32 %v84, %v48
    %v92 = vmul.f32 %v84, %v49
    %v93 = vsub.f32 %v18, %v85
    %v94 = vsub.f32 %v19, %v86
    %v95 = vsub.f32 %v20, %v87
    %v96 = vsub.f32 %v21, %v88
    %v97 = vsub.f32 %v22, %v89
    %v98 = vsub.f32 %v23, %v90
    %v99 = vsub.f32 %v24, %v91
    %v100 = vsub.f32 %v25, %v92
    %v101 = vadd.f32 %v93, %v34
    %v102 = vadd.f32 %v94, %v35
    %v103 = vadd.f32 %v95, %v36
    %v104 = vadd.f32 %v96, %v37
    %v105 = vadd.f32 %v97, %v38
    %v106 = vadd.f32 %v98, %v39
    %v107 = vadd.f32 %v99, %v40
    %v108 = vadd.f32 %v100, %v41
    %v109 = vmul.f32 %v26, %v42
    %v110 = vmul.f32 %v27, %v43
    %v111 = vmul.f32 %v28, %v44
    %v112 = vmul.f32 %v29, %v45
    %v113 = vmul.f32 %v30, %v46
    %v114 = vmul.f32 %v31, %v47
    %v115 = vmul.f32 %v32, %v48
    %v116 = vmul.f32 %v33, %v49
    %v117 = vsel %vm58, %v109, 0.0
    %v118 = vsel %vm58, %v110, 0.0
    %v119 = vadd.f32 %v117, %v118
    %v120 = vsel %vm58, %v111, 0.0
    %v121 = vadd.f32 %v119, %v120
    %v122 = vsel %vm58, %v112, 0.0
    %v123 = vadd.f32 %v121, %v122
    %v124 = vrot.slane %v123, 4
    %v125 = vadd.f32 %v123, %v124
    %v126 = vrot.slane %v125, 2
    %v127 = vadd.f32 %v125, %v126
    %v128 = vrot.slane %v127, 1
    %v129 = vadd.f32 %v127, %v128
    %v130 = vsel %vm58, %v113, 0.0
    %v131 = vsel %vm58, %v114, 0.0
    %v132 = vadd.f32 %v130, %v131
    %v133 = vsel %vm58, %v115, 0.0
    %v134 = vadd.f32 %v132, %v133
    %v135 = vsel %vm58, %v116, 0.0
    %v136 = vadd.f32 %v134, %v135
    %v137 = vrot.slane %v136, 4
    %v138 = vadd.f32 %v136, %v137
    %v139 = vrot.slane %v138, 2
    %v140 = vadd.f32 %v138, %v139
    %v141 = vrot.slane %v140, 1
    %v142 = vadd.f32 %v140, %v141
    %v143 = vmul.f32 %v129, %v42
    %v144 = vmul.f32 %v129, %v43
    %v145 = vmul.f32 %v129, %v44
    %v146 = vmul.f32 %v129, %v45
    %v147 = vmul.f32 %v142, %v46
    %v148 = vmul.f32 %v142, %v47
    %v149 = vmul.f32 %v142, %v48
    %v150 = vmul.f32 %v142, %v49
    %v151 = vsub.f32 %v26, %v143
    %v152 = vsub.f32 %v27, %v144
    %v153 = vsub.f32 %v28, %v145
    %v154 = vsub.f32 %v29, %v146
    %v155 = vsub.f32 %v30, %v147
    %v156 = vsub.f32 %v31, %v148
    %v157 = vsub.f32 %v32, %v149
    %v158 = vsub.f32 %v33, %v150
    %v159 = vsub.f32 %v101, %v151
    %v160 = vsub.f32 %v102, %v152
    %v161 = vsub.f32 %v103, %v153
    %v162 = vsub.f32 %v104, %v154
    %v163 = vsub.f32 %v105, %v155
    %v164 = vsub.f32 %v106, %v156
    %v165 = vsub.f32 %v107, %v157
    %v166 = vsub.f32 %v108, %v158
    %v167 = vmul.f32 %v159, %v159
    %v168 = vmul.f32 %v160, %v160
    %v169 = vmul.f32 %v161, %v161
    %v170 = vmul.f32 %v162, %v162
    %v171 = vmul.f32 %v163, %v163
    %v172 = vmul.f32 %v164, %v164
    %v173 = vmul.f32 %v165, %v165
    %v174 = vmul.f32 %v166, %v166
    %v175 = vsel %vm58, %v167, 0.0
    %v176 = vsel %vm58, %v168, 0.0
    %v177 = vadd.f32 %v175, %v176
    %v178 = vsel %vm58, %v169, 0.0
    %v179 = vadd.f32 %v177, %v178
    %v180 = vsel %vm58, %v170, 0.0
    %v181 = vadd.f32 %v179, %v180
    %v182 = vrot.slane %v181, 4
    %v183 = vadd.f32 %v181, %v182
    %v184 = vrot.slane %v183, 2
    %v185 = vadd.f32 %v183, %v184
    %v186 = vrot.slane %v185, 1
    %v187 = vadd.f32 %v185, %v186
    %v188 = vsel %vm58, %v171, 0.0
    %v189 = vsel %vm58, %v172, 0.0
    %v190 = vadd.f32 %v188, %v189
    %v191 = vsel %vm58, %v173, 0.0
    %v192 = vadd.f32 %v190, %v191
    %v193 = vsel %vm58, %v174, 0.0
    %v194 = vadd.f32 %v192, %v193
    %v195 = vrot.slane %v194, 4
    %v196 = vadd.f32 %v194, %v195
    %v197 = vrot.slane %v196, 2
    %v198 = vadd.f32 %v196, %v197
    %v199 = vrot.slane %v198, 1
    %v200 = vadd.f32 %v198, %v199
    %v201 = vrsqrt.pop %v187
    %v202 = vmul.f32 %v201, %v187
    %v203 = vmul.f32 %v202, %v201
    %v204 = vmul.f32 0.5, %v203
    %v205 = vsub.f32 1.5, %v204
    %v206 = vmul.f32 %v201, %v205
    %v207 = vmul.f32 %v187, %v206
    %vm208 = vcmp.eq.f32.partialorder %v187, inf
    %v209 = vsel %vm208, %v187, %v207
    %vm210 = vcmp.eq.f32.partialorder %v187, 0.0
    %v211 = vand.u32 %v187, 2147483648
    %v212 = vsel %vm210, %v211, %v209
    %v213 = vrsqrt.pop %v200
    %v214 = vmul.f32 %v213, %v200
    %v215 = vmul.f32 %v214, %v213
    %v216 = vmul.f32 0.5, %v215
    %v217 = vsub.f32 1.5, %v216
    %v218 = vmul.f32 %v213, %v217
    %v219 = vmul.f32 %v200, %v218
    %vm220 = vcmp.eq.f32.partialorder %v200, inf
    %v221 = vsel %vm220, %v200, %v219
    %vm222 = vcmp.eq.f32.partialorder %v200, 0.0
    %v223 = vand.u32 %v200, 2147483648
    %v224 = vsel %vm222, %v223, %v221
    %s225 = smul.u32 0, 8
    %v226 = vlaneseq
    %v227 = vand.u32 %v226, 127
    %v228 = vstv %s225
    %v229 = vadd.s32 %v228, %v227
    %vm230 = vcmp.lt.s32.totalorder %v229, 8
    %v231 = vadd.f32 %v212, 1.0
    %v232 = vsub.f32 %v231, %v224
    %v233 = vmax.f32 %v232, 0.0
    %v234 = vsel %vm230, %v233, 0.0
    %vm235 = vcmask 57344
    %v236 = vsel %vm235, %v234, 0.0
    %237 = vadd.xlane.f32.xlu0 %v236
    %v238 = vpop.xlane.xlu0 %237
    %v239 = vrot.slane %v238, 4
    %v240 = vadd.f32 %v238, %v239
    %v241 = vrot.slane %v240, 2
    %v242 = vadd.f32 %v240, %v241
    %v243 = vrot.slane %v242, 1
    %v244 = vadd.f32 %v242, %v243
    %s245 = vtos %v244
    %v246 = vlaneseq
    %v247 = vshrl.u32 %v246, 7
    %vm248 = vcmp.eq.s32.totalorder %v247, 0
    %vm249 = vcmp.eq.s32.totalorder %v227, 0
    %vm250 = vmand %vm248, %vm249
    %v251 = vstv %s245
    %v252 = vsel %vm250, %v251, 0.0
    %253 = vst [vmem:[#allocation2] sm:$0xff] %v252
    // Predicated region
    $region18: #{tpu_custom_call.1} parent=1 // pred_check
      _
    $region19: #{tpu_custom_call.1} parent=1 // pred_check_branch
      %255 = sbr.rel (0) target = $region21
    $region20: #{tpu_custom_call.1} parent=1 // pred_region
      %257 = vsyncadd [#allocation3], 0
      %s259 = sshll.u32 [#allocation2], 4
      %s260 = int_to_ptr.vmem [resolvable:$true] %s259
      %s261 = sshll.u32 %s4, 4
      %s262 = int_to_ptr.hbm [resolvable:$true] %s261
      %264 = dma.vmem_to_hbm [thread:$0]  %s260, 128, %s262, [#allocation3]
    $region21: #{tpu_custom_call.1} parent=1 // pred_fallthru
      _
    // Predicated region
    $region22: #{tpu_custom_call.1} parent=1 // pred_check
      _
    $region23: #{tpu_custom_call.1} parent=1 // pred_check_branch
      %266 = sbr.rel (0) target = $region25
    $region24: #{tpu_custom_call.1} parent=1 // pred_region
      %268 = dma.done [#allocation3], 128
    $region25: #{tpu_custom_call.1} parent=1 // pred_fallthru
      _
    %269 = vsyncpa [#allocation3], 1

</llo_original>
